<compile_context>
chip_gen: v5e
topology: v5e:2x2
jax: 0.10.0
libtpu: 0.0.40
codegen_flags: <defaults>
</compile_context>

<pallas_src>
import functools

import jax
import jax.numpy as jnp
from jax.experimental import pallas as pl
from jax.experimental.pallas import tpu as pltpu


def _gate_conv_kernel(x_ref, w_ref, b_ref, o_ref, *, width):
    # x_ref: (Bt, 1, HW)   flattened single-channel input
    # w_ref: (K*K, C, 1)   per-tap channel columns
    # b_ref: (C, 1)        bias column
    # o_ref: (Bt, C, HW)   flattened gate output
    Bt, C, HW = o_ref.shape
    K = 3                       # fixed 3x3 stencil (module spec)
    W = width
    # Flat zero halo, rounded up to a whole lane tile so every concatenated
    # operand is 128-lane aligned. P >= W + 1 covers the +/-1 row/col shifts.
    P = ((W + 1 + 127) // 128) * 128

    # Column index of each flattened pixel (2-D iota; hoisted out of all loops).
    col = jax.lax.broadcasted_iota(jnp.int32, (1, HW), 1) % W
    on_left_edge = col == 0
    on_right_edge = col == W - 1

    zpad = jnp.zeros((1, P), jnp.float32)
    bias = jnp.broadcast_to(b_ref[...].astype(jnp.float32), (C, HW))  # hoisted

    for bi in range(Bt):                                   # static unroll
        xf = x_ref[bi].astype(jnp.float32)                 # (1, HW)
        # Sources for left / centre / right taps: zero the column that would
        # otherwise wrap into the neighbouring image row after a flat shift.
        x_l = jnp.where(on_right_edge, 0.0, xf)
        x_c = xf
        x_r = jnp.where(on_left_edge, 0.0, xf)
        padded = (jnp.concatenate([zpad, x_l, zpad], axis=1),
                  jnp.concatenate([zpad, x_c, zpad], axis=1),
                  jnp.concatenate([zpad, x_r, zpad], axis=1))   # (1, HW + 2P)

        acc = bias                                         # (C, HW) f32
        for kh in range(K):
            for kw in range(K):
                start = P + (kh - 1) * W + (kw - 1)        # static, >= 0
                patch = padded[kw][:, start:start + HW]    # (1, HW)
                tap = w_ref[kh * K + kw].astype(jnp.float32)   # (C, 1)
                acc = acc + tap * patch                    # dense (C, HW) MAC

        # sigmoid via a single EUP tanh (no VALU divide, no exp overflow).
        gate = 0.5 * (jnp.tanh(0.5 * acc) + 1.0)
        o_ref[bi] = gate.astype(o_ref.dtype)


def _pick_batch_block(B, C, HW, itemsize, max_block_bytes=2 * 1024 * 1024):
    """Largest batch tile whose output block stays modest while (when possible)
    leaving >= 2 grid steps so both v7x TensorCores get work."""
    best = 1
    for bt in range(1, B + 1):
        if B % bt:
            continue
        if bt * C * HW * itemsize > max_block_bytes:
            break
        if B // bt >= 2 or B == 1:
            best = bt
    return best


def gate_conv(x, weight, bias, *, kernel_size=3, batch_block=None):
    """x: (B, 1, H, W); weight: (C, 1, K, K); bias: (C,) -> (B, C, H, W)."""
    B, Cin, H, W = x.shape
    assert Cin == 1, "GateConv expects a single input channel"
    assert kernel_size == 3, "kernel fixed to the module's 3x3 case"
    # TODO(synk): generalize the flat-shift halo handling to kernel_size != 3.
    C = weight.shape[0]
    K = kernel_size
    HW = H * W

    # Free contiguous reshapes / tiny parameter re-layouts (no HBM pass over x,
    # no wrapper-side jnp.pad of the image).
    x_flat = x.reshape(B, 1, HW)
    w_col = jnp.transpose(weight, (2, 3, 0, 1)).reshape(K * K, C, 1)
    b_col = bias.reshape(C, 1)

    if batch_block is None:
        batch_block = _pick_batch_block(B, C, HW, jnp.dtype(x.dtype).itemsize)
    assert B % batch_block == 0
    grid = (B // batch_block,)

    out_flat = pl.pallas_call(
        functools.partial(_gate_conv_kernel, width=W),
        out_shape=jax.ShapeDtypeStruct((B, C, HW), x.dtype),
        grid_spec=pltpu.PrefetchScalarGridSpec(
            num_scalar_prefetch=0,
            grid=grid,
            in_specs=[
                pl.BlockSpec((batch_block, 1, HW), lambda i: (i, 0, 0)),
                pl.BlockSpec((K * K, C, 1), lambda i: (0, 0, 0)),
                pl.BlockSpec((C, 1), lambda i: (0, 0)),
            ],
            out_specs=pl.BlockSpec((batch_block, C, HW), lambda i: (i, 0, 0)),
        ),
        compiler_params=pltpu.CompilerParams(
            dimension_semantics=("parallel",),   # shard batch across TCs
            vmem_limit_bytes=32 * 1024 * 1024,
        ),
    )(x_flat, w_col, b_col)
    return out_flat.reshape(B, C, H, W)


def _reference(x, weight, bias):
    y = jax.lax.conv_general_dilated(
        x, weight, window_strides=(1, 1), padding="SAME",
        dimension_numbers=("NCHW", "OIHW", "NCHW"))
    return jax.nn.sigmoid(y + bias[None, :, None, None])


if __name__ == "__main__":
    B, C, H, W = 2, 4, 16, 16
    K = 3

    key = jax.random.PRNGKey(0)
    kx, kw, kb = jax.random.split(key, 3)

    x = jax.random.normal(kx, (B, 1, H, W), dtype=jnp.float32)

    # Deterministic parameter init mirroring nn.Conv2d default:
    # U(-sqrt(k), sqrt(k)) with k = 1 / (in_channels * K * K)
    bound = (1.0 / (1 * K * K)) ** 0.5
    weight = jax.random.uniform(kw, (C, 1, K, K), minval=-bound, maxval=bound,
                                dtype=jnp.float32)
    bias = jax.random.uniform(kb, (C,), minval=-bound, maxval=bound,
                              dtype=jnp.float32)

    out = gate_conv(x, weight, bias, kernel_size=K)
    out = jax.block_until_ready(out)

    ref = _reference(x, weight, bias)
    assert out.shape == (B, C, H, W)
    # Slightly relaxed tolerance: in-kernel sigmoid uses the EUP tanh path.
    assert jnp.allclose(out, ref, atol=1e-4, rtol=1e-4), "mismatch vs reference conv"

    print("KERNEL_OK")
</pallas_src>

<mosaic_0001>
module attributes {stable_mosaic.version = 11 : i64} {
  func.func @_gate_conv_kernel(%arg0: i32, %arg1: memref<1x1x256xf32, #tpu.memory_space<vmem>>, %arg2: memref<9x4x1xf32, #tpu.memory_space<vmem>>, %arg3: memref<4x1xf32, #tpu.memory_space<vmem>>, %arg4: memref<1x4x256xf32, #tpu.memory_space<vmem>>) attributes {dimension_semantics = [#tpu.dimension_semantics<parallel>], iteration_bounds = array<i64: 2>, scalar_prefetch = 0 : i64, scratch_operands = 0 : i64, tpu.core_type = #tpu.core_type<tc>, window_params = [{transform_indices = @transform_0, window_bounds = array<i64: 1, 1, 256>}, {pipeline_mode = #tpu.pipeline_mode<synchronous>, transform_indices = @transform_1, window_bounds = array<i64: 9, 4, 1>}, {pipeline_mode = #tpu.pipeline_mode<synchronous>, transform_indices = @transform_2, window_bounds = array<i64: 4, 1>}, {transform_indices = @transform_3, window_bounds = array<i64: 1, 4, 256>}]} {
    %0 = tpu.iota {dimensions = array<i32: 1>} : vector<1x256xi32>
    %c16_i32 = arith.constant 16 : i32
    %c0_i32 = arith.constant 0 : i32
    %1 = arith.cmpi eq, %c16_i32, %c0_i32 : i32
    %c1_i32 = arith.constant 1 : i32
    %2 = arith.select %1, %c1_i32, %c16_i32 : i32
    %3 = vector.broadcast %2 : i32 to vector<1x256xi32>
    %4 = arith.remsi %0, %3 : vector<1x256xi32>
    %c0_i32_0 = arith.constant 0 : i32
    %5 = vector.broadcast %c0_i32_0 : i32 to vector<1x256xi32>
    %6 = arith.cmpi ne, %4, %5 : vector<1x256xi32>
    %c0_i32_1 = arith.constant 0 : i32
    %7 = vector.broadcast %c0_i32_1 : i32 to vector<1x256xi32>
    %8 = arith.cmpi slt, %4, %7 : vector<1x256xi32>
    %c0_i32_2 = arith.constant 0 : i32
    %9 = arith.cmpi slt, %2, %c0_i32_2 : i32
    %10 = vector.broadcast %9 : i1 to vector<1x256xi1>
    %11 = vector.broadcast %10 : vector<1x256xi1> to vector<1x256xi1>
    %12 = arith.xori %8, %11 : vector<1x256xi1>
    %13 = arith.andi %12, %6 : vector<1x256xi1>
    %14 = vector.broadcast %2 : i32 to vector<1x256xi32>
    %15 = arith.addi %4, %14 : vector<1x256xi32>
    %16 = arith.select %13, %15, %4 : vector<1x256xi1>, vector<1x256xi32>
    %c0_i32_3 = arith.constant 0 : i32
    %17 = vector.broadcast %c0_i32_3 : i32 to vector<1x256xi32>
    %18 = arith.cmpi eq, %16, %17 : vector<1x256xi32>
    %c15_i32 = arith.constant 15 : i32
    %19 = vector.broadcast %c15_i32 : i32 to vector<1x256xi32>
    %20 = arith.cmpi eq, %16, %19 : vector<1x256xi32>
    %cst = arith.constant 0.000000e+00 : f32
    %21 = vector.broadcast %cst : f32 to vector<1x128xf32>
    %c0 = arith.constant 0 : index
    %c0_4 = arith.constant 0 : index
    %22 = vector.load %arg3[%c0, %c0_4] : memref<4x1xf32, #tpu.memory_space<vmem>>, vector<4x1xf32>
    %23 = vector.shape_cast %22 : vector<4x1xf32> to vector<4x1xf32>
    %24 = vector.broadcast %23 : vector<4x1xf32> to vector<4x256xf32>
    %c0_5 = arith.constant 0 : index
    %c0_6 = arith.constant 0 : index
    %c0_7 = arith.constant 0 : index
    %25 = vector.load %arg1[%c0_5, %c0_6, %c0_7] : memref<1x1x256xf32, #tpu.memory_space<vmem>>, vector<1x1x256xf32>
    %26 = vector.shape_cast %25 : vector<1x1x256xf32> to vector<1x256xf32>
    %cst_8 = arith.constant 0.000000e+00 : f32
    %27 = vector.broadcast %cst_8 : f32 to vector<1x256xf32>
    %28 = arith.select %20, %27, %26 : vector<1x256xi1>, vector<1x256xf32>
    %cst_9 = arith.constant 0.000000e+00 : f32
    %29 = vector.broadcast %cst_9 : f32 to vector<1x256xf32>
    %30 = arith.select %18, %29, %26 : vector<1x256xi1>, vector<1x256xf32>
    %31 = tpu.concatenate %21, %28, %21 in 1 : vector<1x128xf32>, vector<1x256xf32>, vector<1x128xf32> -> vector<1x512xf32>
    %32 = tpu.concatenate %21, %26, %21 in 1 : vector<1x128xf32>, vector<1x256xf32>, vector<1x128xf32> -> vector<1x512xf32>
    %33 = tpu.concatenate %21, %30, %21 in 1 : vector<1x128xf32>, vector<1x256xf32>, vector<1x128xf32> -> vector<1x512xf32>
    %34 = vector.extract_strided_slice %31 {offsets = [0, 111], sizes = [1, 256], strides = [1, 1]} : vector<1x512xf32> to vector<1x256xf32>
    %c0_10 = arith.constant 0 : index
    %c0_11 = arith.constant 0 : index
    %c0_12 = arith.constant 0 : index
    %35 = vector.load %arg2[%c0_10, %c0_11, %c0_12] : memref<9x4x1xf32, #tpu.memory_space<vmem>>, vector<1x4x1xf32>
    %36 = vector.shape_cast %35 : vector<1x4x1xf32> to vector<4x1xf32>
    %37 = vector.broadcast %36 : vector<4x1xf32> to vector<4x256xf32>
    %38 = vector.broadcast %34 : vector<1x256xf32> to vector<4x256xf32>
    %39 = arith.mulf %37, %38 : vector<4x256xf32>
    %40 = arith.addf %24, %39 : vector<4x256xf32>
    %41 = vector.extract_strided_slice %32 {offsets = [0, 112], sizes = [1, 256], strides = [1, 1]} : vector<1x512xf32> to vector<1x256xf32>
    %c1 = arith.constant 1 : index
    %c0_13 = arith.constant 0 : index
    %c0_14 = arith.constant 0 : index
    %42 = vector.load %arg2[%c1, %c0_13, %c0_14] : memref<9x4x1xf32, #tpu.memory_space<vmem>>, vector<1x4x1xf32>
    %43 = vector.shape_cast %42 : vector<1x4x1xf32> to vector<4x1xf32>
    %44 = vector.broadcast %43 : vector<4x1xf32> to vector<4x256xf32>
    %45 = vector.broadcast %41 : vector<1x256xf32> to vector<4x256xf32>
    %46 = arith.mulf %44, %45 : vector<4x256xf32>
    %47 = arith.addf %40, %46 : vector<4x256xf32>
    %48 = vector.extract_strided_slice %33 {offsets = [0, 113], sizes = [1, 256], strides = [1, 1]} : vector<1x512xf32> to vector<1x256xf32>
    %c2 = arith.constant 2 : index
    %c0_15 = arith.constant 0 : index
    %c0_16 = arith.constant 0 : index
    %49 = vector.load %arg2[%c2, %c0_15, %c0_16] : memref<9x4x1xf32, #tpu.memory_space<vmem>>, vector<1x4x1xf32>
    %50 = vector.shape_cast %49 : vector<1x4x1xf32> to vector<4x1xf32>
    %51 = vector.broadcast %50 : vector<4x1xf32> to vector<4x256xf32>
    %52 = vector.broadcast %48 : vector<1x256xf32> to vector<4x256xf32>
    %53 = arith.mulf %51, %52 : vector<4x256xf32>
    %54 = arith.addf %47, %53 : vector<4x256xf32>
    %55 = vector.extract_strided_slice %31 {offsets = [0, 127], sizes = [1, 256], strides = [1, 1]} : vector<1x512xf32> to vector<1x256xf32>
    %c3 = arith.constant 3 : index
    %c0_17 = arith.constant 0 : index
    %c0_18 = arith.constant 0 : index
    %56 = vector.load %arg2[%c3, %c0_17, %c0_18] : memref<9x4x1xf32, #tpu.memory_space<vmem>>, vector<1x4x1xf32>
    %57 = vector.shape_cast %56 : vector<1x4x1xf32> to vector<4x1xf32>
    %58 = vector.broadcast %57 : vector<4x1xf32> to vector<4x256xf32>
    %59 = vector.broadcast %55 : vector<1x256xf32> to vector<4x256xf32>
    %60 = arith.mulf %58, %59 : vector<4x256xf32>
    %61 = arith.addf %54, %60 : vector<4x256xf32>
    %62 = vector.extract_strided_slice %32 {offsets = [0, 128], sizes = [1, 256], strides = [1, 1]} : vector<1x512xf32> to vector<1x256xf32>
    %c4 = arith.constant 4 : index
    %c0_19 = arith.constant 0 : index
    %c0_20 = arith.constant 0 : index
    %63 = vector.load %arg2[%c4, %c0_19, %c0_20] : memref<9x4x1xf32, #tpu.memory_space<vmem>>, vector<1x4x1xf32>
    %64 = vector.shape_cast %63 : vector<1x4x1xf32> to vector<4x1xf32>
    %65 = vector.broadcast %64 : vector<4x1xf32> to vector<4x256xf32>
    %66 = vector.broadcast %62 : vector<1x256xf32> to vector<4x256xf32>
    %67 = arith.mulf %65, %66 : vector<4x256xf32>
    %68 = arith.addf %61, %67 : vector<4x256xf32>
    %69 = vector.extract_strided_slice %33 {offsets = [0, 129], sizes = [1, 256], strides = [1, 1]} : vector<1x512xf32> to vector<1x256xf32>
    %c5 = arith.constant 5 : index
    %c0_21 = arith.constant 0 : index
    %c0_22 = arith.constant 0 : index
    %70 = vector.load %arg2[%c5, %c0_21, %c0_22] : memref<9x4x1xf32, #tpu.memory_space<vmem>>, vector<1x4x1xf32>
    %71 = vector.shape_cast %70 : vector<1x4x1xf32> to vector<4x1xf32>
    %72 = vector.broadcast %71 : vector<4x1xf32> to vector<4x256xf32>
    %73 = vector.broadcast %69 : vector<1x256xf32> to vector<4x256xf32>
    %74 = arith.mulf %72, %73 : vector<4x256xf32>
    %75 = arith.addf %68, %74 : vector<4x256xf32>
    %76 = vector.extract_strided_slice %31 {offsets = [0, 143], sizes = [1, 256], strides = [1, 1]} : vector<1x512xf32> to vector<1x256xf32>
    %c6 = arith.constant 6 : index
    %c0_23 = arith.constant 0 : index
    %c0_24 = arith.constant 0 : index
    %77 = vector.load %arg2[%c6, %c0_23, %c0_24] : memref<9x4x1xf32, #tpu.memory_space<vmem>>, vector<1x4x1xf32>
    %78 = vector.shape_cast %77 : vector<1x4x1xf32> to vector<4x1xf32>
    %79 = vector.broadcast %78 : vector<4x1xf32> to vector<4x256xf32>
    %80 = vector.broadcast %76 : vector<1x256xf32> to vector<4x256xf32>
    %81 = arith.mulf %79, %80 : vector<4x256xf32>
    %82 = arith.addf %75, %81 : vector<4x256xf32>
    %83 = vector.extract_strided_slice %32 {offsets = [0, 144], sizes = [1, 256], strides = [1, 1]} : vector<1x512xf32> to vector<1x256xf32>
    %c7 = arith.constant 7 : index
    %c0_25 = arith.constant 0 : index
    %c0_26 = arith.constant 0 : index
    %84 = vector.load %arg2[%c7, %c0_25, %c0_26] : memref<9x4x1xf32, #tpu.memory_space<vmem>>, vector<1x4x1xf32>
    %85 = vector.shape_cast %84 : vector<1x4x1xf32> to vector<4x1xf32>
    %86 = vector.broadcast %85 : vector<4x1xf32> to vector<4x256xf32>
    %87 = vector.broadcast %83 : vector<1x256xf32> to vector<4x256xf32>
    %88 = arith.mulf %86, %87 : vector<4x256xf32>
    %89 = arith.addf %82, %88 : vector<4x256xf32>
    %90 = vector.extract_strided_slice %33 {offsets = [0, 145], sizes = [1, 256], strides = [1, 1]} : vector<1x512xf32> to vector<1x256xf32>
    %c8 = arith.constant 8 : index
    %c0_27 = arith.constant 0 : index
    %c0_28 = arith.constant 0 : index
    %91 = vector.load %arg2[%c8, %c0_27, %c0_28] : memref<9x4x1xf32, #tpu.memory_space<vmem>>, vector<1x4x1xf32>
    %92 = vector.shape_cast %91 : vector<1x4x1xf32> to vector<4x1xf32>
    %93 = vector.broadcast %92 : vector<4x1xf32> to vector<4x256xf32>
    %94 = vector.broadcast %90 : vector<1x256xf32> to vector<4x256xf32>
    %95 = arith.mulf %93, %94 : vector<4x256xf32>
    %96 = arith.addf %89, %95 : vector<4x256xf32>
    %cst_29 = arith.constant 5.000000e-01 : f32
    %97 = vector.broadcast %cst_29 : f32 to vector<4x256xf32>
    %98 = arith.mulf %97, %96 : vector<4x256xf32>
    %99 = math.tanh %98 : vector<4x256xf32>
    %cst_30 = arith.constant 1.000000e+00 : f32
    %100 = vector.broadcast %cst_30 : f32 to vector<4x256xf32>
    %101 = arith.addf %99, %100 : vector<4x256xf32>
    %cst_31 = arith.constant 5.000000e-01 : f32
    %102 = vector.broadcast %cst_31 : f32 to vector<4x256xf32>
    %103 = arith.mulf %102, %101 : vector<4x256xf32>
    %c0_32 = arith.constant 0 : index
    %c0_33 = arith.constant 0 : index
    %c0_34 = arith.constant 0 : index
    %104 = vector.load %arg4[%c0_32, %c0_33, %c0_34] : memref<1x4x256xf32, #tpu.memory_space<vmem>>, vector<1x4x256xf32>
    %105 = vector.shape_cast %104 : vector<1x4x256xf32> to vector<4x256xf32>
    %106 = vector.shape_cast %103 : vector<4x256xf32> to vector<1x4x256xf32>
    tpu.vector_store %arg4[%c0_32, %c0_33, %c0_34], %106 {strides = array<i32>} : memref<1x4x256xf32, #tpu.memory_space<vmem>>, vector<1x4x256xf32>,
    return
  }
  func.func @transform_0(%arg0: i32) -> (i32, i32, i32) {
    %c0_i32 = arith.constant 0 : i32
    %c0_i32_0 = arith.constant 0 : i32
    %c0_i32_1 = arith.constant 0 : i32
    return %arg0, %c0_i32, %c0_i32_0 : i32, i32, i32
  }
  func.func @transform_1(%arg0: i32) -> (i32, i32, i32) {
    %c0_i32 = arith.constant 0 : i32
    %c0_i32_0 = arith.constant 0 : i32
    %c0_i32_1 = arith.constant 0 : i32
    %c0_i32_2 = arith.constant 0 : i32
    return %c0_i32, %c0_i32_0, %c0_i32_1 : i32, i32, i32
  }
  func.func @transform_2(%arg0: i32) -> (i32, i32) {
    %c0_i32 = arith.constant 0 : i32
    %c0_i32_0 = arith.constant 0 : i32
    %c0_i32_1 = arith.constant 0 : i32
    return %c0_i32, %c0_i32_0 : i32, i32
  }
  func.func @transform_3(%arg0: i32) -> (i32, i32, i32) {
    %c0_i32 = arith.constant 0 : i32
    %c0_i32_0 = arith.constant 0 : i32
    %c0_i32_1 = arith.constant 0 : i32
    return %arg0, %c0_i32, %c0_i32_0 : i32, i32, i32
  }
}

</mosaic_0001>

<llo_original>
// kernel: tpu_custom_call.1
$region0: #{tpu_custom_call.1}
  #allocation0 [shape = 'u32[]', space=smem, size = 0x4, offset = 0x4, fixed_abs, tag = 'smem constant byte address 0x4 - core index']
  #allocation1 [shape = 'u32[72,128]{1,0:T(1,128)}', space=vmem, size = 0x9000, scoped, tag = 'internal scratch']
  %s0 = inlined_call_operand.vmem [shape: f32[2,1,256], index: 0, kind: input, shape index: {}]
  %s1 = inlined_call_operand.vmem [shape: f32[9,4,1], index: 1, kind: input, shape index: {}]
  %s2 = inlined_call_operand.vmem [shape: f32[4,1], index: 2, kind: input, shape index: {}]
  %s3 = inlined_call_operand.hbm [shape: f32[2,4,256], index: 3, kind: output, shape index: {}]
  %s4 = sld [smem:[#allocation0]]
  $region45: #{tpu_custom_call.1} parent=0
    _
  %s6 = ssub.s32 1, %s4
  %s7 = scalar_select 0, %s6, %s4
  $region1: #{tpu_custom_call.1} parent=0
    #allocation2 [shape = 'u8[8192]{0}', space=vmem, size = 0x2000, scoped, tag = 'output window, operand 0']
    #allocation3 [shape = 's32[2]{0}', space=sflag, size = 0x8, scoped, tag = 'scoped memory for tpu_custom_call.1']
    %8 = vsyncpa [#allocation3], 0
    %s9 = scalar_lea.sflag [#allocation3], 1
    %10 = vsyncpa %s9, 0
    loop: start=0, step=1, limit=4
    $region2: #{tpu_custom_call.1} parent=1 // loop_pre_header
      _
    $region3: #{tpu_custom_call.1} parent=1 // loop_header
      %s12 = sphi 0, %s16
      %p13 = scmp.ge.s32.totalorder %s12, 4
      %s22 = sphi 0, %s24
      %s25 = sphi 0, %s22
      %s26 = sphi 0, %s25
      %s42 = sphi 0, %s26
      %s46 = sphi 0, %s46
      %s48 = sphi 0, %s46
      %s49 = sphi 0, %s48
      %s63 = sphi 0, %s49
      %s67 = sphi 0, %s67
      %s69 = sphi 0, %s67
      %s70 = sphi 0, %s69
      %s84 = sphi 0, %s70
      %s90 = sphi 0, %s92
      %s93 = sphi 0, %s90
      %s94 = sphi 0, %s93
      %s110 = sphi 0, %s94
    $region4: #{tpu_custom_call.1} parent=1 // loop_header_branch
      %15 = sbr.rel (%p13) target = $region8
    $region5: #{tpu_custom_call.1} parent=1 // loop_body
      %s17 = ssub.s32 %s12, 1
      %s18 = ssub.s32 %s12, 2
      %s19 = sadd.s32 %s12, 1
      %s20 = ssub.s32 %s12, %s19
      %p21 = scmp.eq.s32.totalorder %s20, 0
      %s23 = sadd.s32 %s22, 1
      %s24 = scalar_select %p21, %s22, %s23
      %p27 = pneg %p21
      %p28 = scmp.eq.s32.totalorder %s12, 1
      %p29 = por %p27, %p28
      %p30 = scmp.ne.s32.totalorder %s22, %s25
      %p31 = scmp.eq.s32.totalorder %s12, 0
      %p32 = por %p30, %p31
      %p33 = scmp.ne.s32.totalorder %s22, %s25
      %p34 = scmp.eq.s32.totalorder %s17, 1
      %p35 = por %p33, %p34
      %p36 = scmp.ne.s32.totalorder %s25, %s26
      %p37 = scmp.eq.s32.totalorder %s17, 0
      %p38 = por %p36, %p37
      %p39 = scmp.ne.s32.totalorder %s25, %s26
      %p40 = scmp.eq.s32.totalorder %s18, 1
      %p41 = por %p39, %p40
      %p43 = scmp.ne.s32.totalorder %s26, %s42
      %p44 = scmp.eq.s32.totalorder %s18, 0
      %p45 = por %p43, %p44
      %s47 = sadd.s32 %s46, 1
      %p50 = scmp.eq.s32.totalorder %s12, 1
      %p51 = scmp.ne.s32.totalorder %s46, %s48
      %p52 = scmp.eq.s32.totalorder %s12, 0
      %p53 = por %p51, %p52
      %p54 = scmp.ne.s32.totalorder %s46, %s48
      %p55 = scmp.eq.s32.totalorder %s17, 1
      %p56 = por %p54, %p55
      %p57 = scmp.ne.s32.totalorder %s48, %s49
      %p58 = scmp.eq.s32.totalorder %s17, 0
      %p59 = por %p57, %p58
      %p60 = scmp.ne.s32.totalorder %s48, %s49
      %p61 = scmp.eq.s32.totalorder %s18, 1
      %p62 = por %p60, %p61
      %p64 = scmp.ne.s32.totalorder %s49, %s63
      %p65 = scmp.eq.s32.totalorder %s18, 0
      %p66 = por %p64, %p65
      %s68 = sadd.s32 %s67, 1
      %p71 = scmp.eq.s32.totalorder %s12, 1
      %p72 = scmp.ne.s32.totalorder %s67, %s69
      %p73 = scmp.eq.s32.totalorder %s12, 0
      %p74 = por %p72, %p73
      %p75 = scmp.ne.s32.totalorder %s67, %s69
      %p76 = scmp.eq.s32.totalorder %s17, 1
      %p77 = por %p75, %p76
      %p78 = scmp.ne.s32.totalorder %s69, %s70
      %p79 = scmp.eq.s32.totalorder %s17, 0
      %p80 = por %p78, %p79
      %p81 = scmp.ne.s32.totalorder %s69, %s70
      %p82 = scmp.eq.s32.totalorder %s18, 1
      %p83 = por %p81, %p82
      %p85 = scmp.ne.s32.totalorder %s70, %s84
      %p86 = scmp.eq.s32.totalorder %s18, 0
      %p87 = por %p85, %p86
      %s88 = ssub.s32 %s12, %s19
      %p89 = scmp.eq.s32.totalorder %s88, 0
      %s91 = sadd.s32 %s90, 1
      %s92 = scalar_select %p89, %s90, %s91
      %p95 = pneg %p89
      %p96 = scmp.eq.s32.totalorder %s12, 1
      %p97 = por %p95, %p96
      %p98 = scmp.ne.s32.totalorder %s90, %s93
      %p99 = scmp.eq.s32.totalorder %s12, 0
      %p100 = por %p98, %p99
      %p101 = scmp.ne.s32.totalorder %s90, %s93
      %p102 = scmp.eq.s32.totalorder %s17, 1
      %p103 = por %p101, %p102
      %p104 = scmp.ne.s32.totalorder %s93, %s94
      %p105 = scmp.eq.s32.totalorder %s17, 0
      %p106 = por %p104, %p105
      %p107 = scmp.ne.s32.totalorder %s93, %s94
      %p108 = scmp.eq.s32.totalorder %s18, 1
      %p109 = por %p107, %p108
      %p111 = scmp.ne.s32.totalorder %s94, %s110
      %p112 = scmp.eq.s32.totalorder %s18, 0
      %p113 = por %p111, %p112
      %p114 = scmp.le.s32.totalorder 1, %s12
      %p115 = scmp.lt.s32.totalorder %s12, 3
      %p116 = pnand %p114, %p115
      %p117 = pneg %p116
      // Predicated region
      $region9: #{tpu_custom_call.1} parent=5 // pred_check
        _
      $region10: #{tpu_custom_call.1} parent=5 // pred_check_branch
        %119 = sbr.rel (%p116) target = $region12
      $region11: #{tpu_custom_call.1} parent=5 // pred_region
        %s120 = ssub.s32 %s12, 1
        // Predicated region
        $region13: #{tpu_custom_call.1} parent=11 // pred_check
          %p121 = pneg %p59
        $region14: #{tpu_custom_call.1} parent=11 // pred_check_branch
          %123 = sbr.rel (%p121) target = $region16
        $region15: #{tpu_custom_call.1} parent=11 // pred_region
          _
        $region16: #{tpu_custom_call.1} parent=11 // pred_fallthru
          _
        // Predicated region
        $region17: #{tpu_custom_call.1} parent=11 // pred_check
          %p124 = pneg %p80
        $region18: #{tpu_custom_call.1} parent=11 // pred_check_branch
          %126 = sbr.rel (%p124) target = $region20
        $region19: #{tpu_custom_call.1} parent=11 // pred_region
          _
        $region20: #{tpu_custom_call.1} parent=11 // pred_fallthru
          _
      $region12: #{tpu_custom_call.1} parent=5 // pred_fallthru
        _
      %p127 = scmp.lt.s32.totalorder %s12, 2
      // Predicated region
      $region21: #{tpu_custom_call.1} parent=5 // pred_check
        %p128 = pneg %p127
      $region22: #{tpu_custom_call.1} parent=5 // pred_check_branch
        %130 = sbr.rel (%p128) target = $region24
      $region23: #{tpu_custom_call.1} parent=5 // pred_region
        // Predicated region
        $region25: #{tpu_custom_call.1} parent=23 // pred_check
          %p131 = pneg %p32
        $region26: #{tpu_custom_call.1} parent=23 // pred_check_branch
          %133 = sbr.rel (%p131) target = $region28
        $region27: #{tpu_custom_call.1} parent=23 // pred_region
          %p134 = scmp.lt.s32.totalorder %s12, 1
          %s135 = scalar_select %p134, %s12, 1
          %s136 = smul.addr %s135, 2
          %s137 = scalar_lea.vmem %s0, %s136
        $region28: #{tpu_custom_call.1} parent=23 // pred_fallthru
          _
      $region24: #{tpu_custom_call.1} parent=5 // pred_fallthru
        _
      %p138 = scmp.le.s32.totalorder 1, %s12
      %p139 = scmp.lt.s32.totalorder %s12, 3
      %p140 = pnand %p138, %p139
      %p141 = pneg %p140
      // Predicated region
      $region29: #{tpu_custom_call.1} parent=5 // pred_check
        _
      $region30: #{tpu_custom_call.1} parent=5 // pred_check_branch
        %143 = sbr.rel (%p140) target = $region32
      $region31: #{tpu_custom_call.1} parent=5 // pred_region
        %s144 = ssub.s32 %s12, 1
        %p145 = scmp.lt.s32.totalorder %s17, 1
        %s146 = scalar_select %p145, %s17, 1
        %s147 = smul.addr %s146, 2
        %s148 = scalar_lea.vmem %s0, %s147
        %p149 = pneg %p38
        %p150 = pneg %p35
        %p151 = pneg %p59
        %p152 = pneg %p56
        %p153 = pneg %p80
        %p154 = pneg %p77
        %p155 = pneg %p106
        %p156 = pneg %p103
        %s157 = sand.u32 %s93, 1
        %s158 = scalar_lea.sflag [#allocation3], %s157
        %s159 = sand.u32 %s93, 1
        %s160 = smul.addr %s159, 8
        %s161 = scalar_lea.vmem [#allocation2], %s160
        %p162 = scmp.lt.s32.totalorder %s17, 1
        %s163 = scalar_select %p162, %s17, 1
        %s164 = smul.addr %s163, 2
        %s165 = scalar_lea.vmem %s0, %s164
        %v166 = vlaneseq
        %v167 = vand.u32 %v166, 127
        %v168 = vadd.s32 %v167, 128
        %vm169 = vcmp.lt.s32.totalorder %v167, 0
        %v170 = vsub.s32 0, %v167
        %v171 = vsel %vm169, %v170, %v167
        %v172 = vshrl.u32 %v171, 4
        %v173 = vand.u32 %v171, 15
        %v174 = vsub.s32 0, %v173
        %v175 = vsel %vm169, %v174, %v173
        %vm176 = vcmp.lt.s32.totalorder %v168, 0
        %v177 = vsub.s32 0, %v168
        %v178 = vsel %vm176, %v177, %v168
        %v179 = vshrl.u32 %v178, 4
        %v180 = vand.u32 %v178, 15
        %v181 = vsub.s32 0, %v180
        %v182 = vsel %vm176, %v181, %v180
        %vm183 = vcmp.ne.s32.totalorder %v175, 0
        %vm184 = vcmp.ne.s32.totalorder %v182, 0
        %vm185 = vcmp.lt.s32.totalorder %v175, 0
        %vm186 = vcmp.lt.s32.totalorder %v182, 0
        %vm187 = vmand %vm185, %vm183
        %vm188 = vmand %vm186, %vm184
        %v189 = vadd.s32 %v175, 16
        %v190 = vadd.s32 %v182, 16
        %v191 = vsel %vm187, %v189, %v175
        %v192 = vsel %vm188, %v190, %v182
        %vm193 = vcmp.eq.s32.totalorder %v191, 0
        %vm194 = vcmp.eq.s32.totalorder %v192, 0
        %vm195 = vcmp.eq.s32.totalorder %v191, 15
        %vm196 = vcmp.eq.s32.totalorder %v192, 15
        %v197 = vld [vmem:[%s2] sm:$0xf]
        %199 = vset.pattern.permute.xlu0 0
        %200 = vperm.xlu0 %199, %v197
        %v201 = vpop.permute.xlu0 %200
        %v203 = vld [vmem:[%s165] sm:$0x3]
        %v205 = vperm.slane %v203, 0
        %v206 = vperm.slane %v203, 1
        %v209 = vsel %vm195, 0.0, %v205
        %v210 = vsel %vm196, 0.0, %v206
        %v211 = vsel %vm193, 0.0, %v205
        %v212 = vsel %vm194, 0.0, %v206
        %v213 = vld [vmem:[%s1] sm:$0xf]
        %215 = vset.pattern.permute.xlu0 0
        %216 = vperm.xlu0 %215, %v213
        %v217 = vpop.permute.xlu0 %216
        %v219 = vperm.slane 0.0, 0
        %v220 = vperm.slane %v209, 0
        %v221 = vperm.slane %v210, 0
        %v222 = vmul.f32 %v217, %v219
        %v223 = vmul.f32 %v217, %v220
        %v224 = vmul.f32 %v217, %v221
        %v225 = vadd.f32 %v201, %v222
        %v226 = vadd.f32 %v201, %v223
        %v227 = vadd.f32 %v201, %v224
        %s228 = scalar_lea.vmem %s1, 4
        %v229 = vld [vmem:[%s228] sm:$0xf]
        %231 = vset.pattern.permute.xlu0 0
        %232 = vperm.xlu0 %231, %v229
        %v233 = vpop.permute.xlu0 %232
        %v235 = vperm.slane %v205, 0
        %v236 = vperm.slane %v206, 0
        %v237 = vmul.f32 %v233, %v219
        %v238 = vmul.f32 %v233, %v235
        %v239 = vmul.f32 %v233, %v236
        %243 = vrot.lane.b32.xlu0 %v237, 127
        %v244 = vpop.permute.xlu0 %243
        %245 = vrot.lane.b32.xlu0 %v238, 127
        %v246 = vpop.permute.xlu0 %245
        %247 = vrot.lane.b32.xlu0 %v239, 127
        %v248 = vpop.permute.xlu0 %247
        %vm249 = vcmask 1039360
        %v250 = vsel %vm249, %v244, %v246
        %v251 = vsel %vm249, %v246, %v248
        %v255 = vadd.f32 %v225, %v250
        %v256 = vadd.f32 %v226, %v251
        %v257 = vadd.f32 %v227, %v248
        %s258 = scalar_lea.vmem %s1, 8
        %v259 = vld [vmem:[%s258] sm:$0xf]
        %261 = vset.pattern.permute.xlu0 0
        %262 = vperm.xlu0 %261, %v259
        %v263 = vpop.permute.xlu0 %262
        %v265 = vperm.slane %v211, 0
        %v266 = vperm.slane %v212, 0
        %v267 = vmul.f32 %v263, %v219
        %v268 = vmul.f32 %v263, %v265
        %v269 = vmul.f32 %v263, %v266
        %273 = vrot.lane.b32.xlu0 %v267, 126
        %v274 = vpop.permute.xlu0 %273
        %275 = vrot.lane.b32.xlu0 %v268, 126
        %v276 = vpop.permute.xlu0 %275
        %277 = vrot.lane.b32.xlu0 %v269, 126
        %v278 = vpop.permute.xlu0 %277
        %vm279 = vcmask 1031168
        %v280 = vsel %vm279, %v274, %v276
        %v281 = vsel %vm279, %v276, %v278
        %v285 = vadd.f32 %v255, %v280
        %v286 = vadd.f32 %v256, %v281
        %v287 = vadd.f32 %v257, %v278
        %s288 = scalar_lea.vmem %s1, 12
        %v289 = vld [vmem:[%s288] sm:$0xf]
        %291 = vset.pattern.permute.xlu0 0
        %292 = vperm.xlu0 %291, %v289
        %v293 = vpop.permute.xlu0 %292
        %v295 = vmul.f32 %v293, %v219
        %v296 = vmul.f32 %v293, %v220
        %v297 = vmul.f32 %v293, %v221
        %301 = vrot.lane.b32.xlu0 %v295, 112
        %v302 = vpop.permute.xlu0 %301
        %303 = vrot.lane.b32.xlu0 %v296, 112
        %v304 = vpop.permute.xlu0 %303
        %305 = vrot.lane.b32.xlu0 %v297, 112
        %v306 = vpop.permute.xlu0 %305
        %vm307 = vcmask 916480
        %v308 = vsel %vm307, %v302, %v304
        %v309 = vsel %vm307, %v304, %v306
        %v313 = vadd.f32 %v285, %v308
        %v314 = vadd.f32 %v286, %v309
        %v315 = vadd.f32 %v287, %v306
        %s316 = scalar_lea.vmem %s1, 16
        %v317 = vld [vmem:[%s316] sm:$0xf]
        %319 = vset.pattern.permute.xlu0 0
        %320 = vperm.xlu0 %319, %v317
        %v321 = vpop.permute.xlu0 %320
        %v323 = vmul.f32 %v321, %v235
        %v324 = vmul.f32 %v321, %v236
        %327 = vrot.lane.b32.xlu0 %v323, 111
        %v328 = vpop.permute.xlu0 %327
        %329 = vrot.lane.b32.xlu0 %v324, 111
        %v330 = vpop.permute.xlu0 %329
        %vm331 = vcmask 908288
        %v332 = vsel %vm331, %v328, %v330
        %v336 = vadd.f32 %v313, %v328
        %v337 = vadd.f32 %v314, %v332
        %v338 = vadd.f32 %v315, %v330
        %s339 = scalar_lea.vmem %s1, 20
        %v340 = vld [vmem:[%s339] sm:$0xf]
        %342 = vset.pattern.permute.xlu0 0
        %343 = vperm.xlu0 %342, %v340
        %v344 = vpop.permute.xlu0 %343
        %v346 = vmul.f32 %v344, %v265
        %v347 = vmul.f32 %v344, %v266
        %v348 = vmul.f32 %v344, %v219
        %352 = vrot.lane.b32.xlu0 %v346, 110
        %v353 = vpop.permute.xlu0 %352
        %354 = vrot.lane.b32.xlu0 %v347, 110
        %v355 = vpop.permute.xlu0 %354
        %356 = vrot.lane.b32.xlu0 %v348, 110
        %v357 = vpop.permute.xlu0 %356
        %vm358 = vcmask 900096
        %v359 = vsel %vm358, %v353, %v355
        %v360 = vsel %vm358, %v355, %v357
        %v364 = vadd.f32 %v336, %v353
        %v365 = vadd.f32 %v337, %v359
        %v366 = vadd.f32 %v338, %v360
        %s367 = scalar_lea.vmem %s1, 24
        %v368 = vld [vmem:[%s367] sm:$0xf]
        %370 = vset.pattern.permute.xlu0 0
        %371 = vperm.xlu0 %370, %v368
        %v372 = vpop.permute.xlu0 %371
        %v374 = vmul.f32 %v372, %v220
        %v375 = vmul.f32 %v372, %v221
        %v376 = vmul.f32 %v372, %v219
        %380 = vrot.lane.b32.xlu0 %v374, 96
        %v381 = vpop.permute.xlu0 %380
        %382 = vrot.lane.b32.xlu0 %v375, 96
        %v383 = vpop.permute.xlu0 %382
        %384 = vrot.lane.b32.xlu0 %v376, 96
        %v385 = vpop.permute.xlu0 %384
        %vm386 = vcmask 785408
        %v387 = vsel %vm386, %v381, %v383
        %v388 = vsel %vm386, %v383, %v385
        %v392 = vadd.f32 %v364, %v381
        %v393 = vadd.f32 %v365, %v387
        %v394 = vadd.f32 %v366, %v388
        %s395 = scalar_lea.vmem %s1, 28
        %v396 = vld [vmem:[%s395] sm:$0xf]
        %398 = vset.pattern.permute.xlu0 0
        %399 = vperm.xlu0 %398, %v396
        %v400 = vpop.permute.xlu0 %399
        %v402 = vmul.f32 %v400, %v235
        %v403 = vmul.f32 %v400, %v236
        %v404 = vmul.f32 %v400, %v219
        %408 = vrot.lane.b32.xlu0 %v402, 95
        %v409 = vpop.permute.xlu0 %408
        %410 = vrot.lane.b32.xlu0 %v403, 95
        %v411 = vpop.permute.xlu0 %410
        %412 = vrot.lane.b32.xlu0 %v404, 95
        %v413 = vpop.permute.xlu0 %412
        %vm414 = vcmask 777216
        %v415 = vsel %vm414, %v409, %v411
        %v416 = vsel %vm414, %v411, %v413
        %v420 = vadd.f32 %v392, %v409
        %v421 = vadd.f32 %v393, %v415
        %v422 = vadd.f32 %v394, %v416
        %s423 = scalar_lea.vmem %s1, 32
        %v424 = vld [vmem:[%s423] sm:$0xf]
        %426 = vset.pattern.permute.xlu0 0
        %427 = vperm.xlu0 %426, %v424
        %v428 = vpop.permute.xlu0 %427
        %v430 = vmul.f32 %v428, %v265
        %v431 = vmul.f32 %v428, %v266
        %v432 = vmul.f32 %v428, %v219
        %436 = vrot.lane.b32.xlu0 %v430, 94
        %v437 = vpop.permute.xlu0 %436
        %438 = vrot.lane.b32.xlu0 %v431, 94
        %v439 = vpop.permute.xlu0 %438
        %440 = vrot.lane.b32.xlu0 %v432, 94
        %v441 = vpop.permute.xlu0 %440
        %vm442 = vcmask 769024
        %v443 = vsel %vm442, %v437, %v439
        %v444 = vsel %vm442, %v439, %v441
        %v448 = vadd.f32 %v420, %v437
        %v449 = vadd.f32 %v421, %v443
        %v450 = vadd.f32 %v422, %v444
        %v451 = vmul.f32 %v448, 0.5
        %v452 = vmul.f32 %v449, 0.5
        %v453 = vmul.f32 %v450, 0.5
        %v454 = vtanh.pop %v451
        %v455 = vtanh.pop %v452
        %v456 = vtanh.pop %v453
        %v457 = vadd.f32 %v454, 1.0
        %v458 = vadd.f32 %v455, 1.0
        %v459 = vadd.f32 %v456, 1.0
        %v460 = vmul.f32 %v457, 0.5
        %v461 = vmul.f32 %v458, 0.5
        %v462 = vmul.f32 %v459, 0.5
        %v466 = vrot.slane %v461, 4
        %vm467 = vcmask 1043456
        %v468 = vsel %vm467, %v460, %v466
        %469 = vrot.lane.b32.xlu0 %v468, 17
        %v470 = vpop.permute.xlu0 %469
        %471 = vrot.lane.b32.xlu0 %v462, 17
        %v472 = vpop.permute.xlu0 %471
        %v473 = vrot.slane %v470, 4
        %v474 = vrot.slane %v472, 4
        %v475 = vsel %vm467, %v473, %v474
        %vm476 = vcmask 138240
        %v477 = vsel %vm476, %v470, %v475
        %479 = vst [vmem:[%s161] sm:$0xff] %v477
        %s480 = sand.u32 %s93, 1
        %s481 = scalar_lea.sflag [#allocation3], %s480
        %s482 = sand.u32 %s93, 1
        %s483 = smul.addr %s482, 8
        %s484 = scalar_lea.vmem [#allocation2], %s483
        // Predicated region
        $region33: #{tpu_custom_call.1} parent=31 // pred_check
          %p485 = pneg %p103
        $region34: #{tpu_custom_call.1} parent=31 // pred_check_branch
          %487 = sbr.rel (%p485) target = $region36
        $region35: #{tpu_custom_call.1} parent=31 // pred_region
          %489 = vsyncadd %s481, 0
          %s490 = smul.addr %s17, 2
          %s491 = smul.addr %s490, 4
          %s492 = scalar_lea.hbm %s3, %s491
          %s494 = sshll.u32 %s484, 4
          %s495 = int_to_ptr.vmem [resolvable:$true] %s494
          %s496 = sshll.u32 %s492, 4
          %s497 = int_to_ptr.hbm [resolvable:$true] %s496
          %499 = dma.vmem_to_hbm [thread:$0]  %s495, 128, %s497, %s481
        $region36: #{tpu_custom_call.1} parent=31 // pred_fallthru
          _
      $region32: #{tpu_custom_call.1} parent=5 // pred_fallthru
        _
      %p500 = scmp.le.s32.totalorder 2, %s12
      // Predicated region
      $region37: #{tpu_custom_call.1} parent=5 // pred_check
        %p501 = pneg %p500
      $region38: #{tpu_custom_call.1} parent=5 // pred_check_branch
        %503 = sbr.rel (%p501) target = $region40
      $region39: #{tpu_custom_call.1} parent=5 // pred_region
        %s504 = ssub.s32 %s12, 2
        // Predicated region
        $region41: #{tpu_custom_call.1} parent=39 // pred_check
          %p505 = pneg %p109
        $region42: #{tpu_custom_call.1} parent=39 // pred_check_branch
          %507 = sbr.rel (%p505) target = $region44
        $region43: #{tpu_custom_call.1} parent=39 // pred_region
          %s508 = sand.u32 %s94, 1
          %s509 = scalar_lea.sflag [#allocation3], %s508
          %s510 = sand.u32 %s94, 1
          %s511 = smul.addr %s510, 8
          %s512 = scalar_lea.vmem [#allocation2], %s511
          %514 = dma.done %s509, 128
        $region44: #{tpu_custom_call.1} parent=39 // pred_fallthru
          _
      $region40: #{tpu_custom_call.1} parent=5 // pred_fallthru
        _
    $region6: #{tpu_custom_call.1} parent=1 // loop_footer
      %s16 = sadd.s32 1, %s12
    $region7: #{tpu_custom_call.1} parent=1 // loop_footer_branch
      %11 = sbr.rel target = $region3
    $region8: #{tpu_custom_call.1} parent=1 // loop_exit
      _
    %515 = vsyncpa [#allocation3], 1
    %s516 = scalar_lea.sflag [#allocation3], 1
    %517 = vsyncpa %s516, 1

</llo_original>
